<compile_context>
chip_gen: v5e
topology: v5e:2x2
jax: 0.10.0
libtpu: 0.0.40
codegen_flags: <defaults>
</compile_context>

<pallas_src>
import functools

import jax
import jax.numpy as jnp
from jax import lax
from jax.experimental import pallas as pl
from jax.experimental.pallas import tpu as pltpu


def _flash_attn_kernel(q_ref, kt_ref, v_ref, wo_ref, ob_ref, out_ref,
                       m_scr, l_scr, acc_scr,
                       *, seq_len, block_k, need_mask):
    ki = pl.program_id(2)
    nk = pl.num_programs(2)

    # ---- init accumulators for this (batch, query tile).
    @pl.when(ki == 0)
    def _init():
        m_scr[...] = jnp.full(m_scr.shape, -jnp.inf, dtype=m_scr.dtype)
        l_scr[...] = jnp.zeros(l_scr.shape, dtype=l_scr.dtype)
        acc_scr[...] = jnp.zeros(acc_scr.shape, dtype=acc_scr.dtype)

    q = q_ref[0]      # (H, TQ, K)   (scale already folded in)
    kt = kt_ref[0]    # (H, K, TK)   (pre-transposed in wrapper)
    v = v_ref[0]      # (H, TK, K)

    # scores: batched plain matmul (TQ,K)x(K,TK) per head -> (H, TQ, TK), f32 acc.
    s = lax.dot_general(q, kt, (((2,), (1,)), ((0,), (0,))),
                        preferred_element_type=jnp.float32)

    if need_mask:
        # Padded key positions (only present in the last key tile) -> huge negative.
        col = ki * block_k + lax.broadcasted_iota(jnp.int32, s.shape, 2)
        s = jnp.where(col < seq_len, s, jnp.float32(-1e30))

    # ---- online softmax (all heads batched; m/l are (H, TQ, 1) f32 scratch).
    m_prev = m_scr[...]
    m_new = jnp.maximum(m_prev, jnp.max(s, axis=-1, keepdims=True))
    alpha = jnp.exp(m_prev - m_new)
    p = jnp.exp(s - m_new)                                           # (H, TQ, TK)
    l_scr[...] = alpha * l_scr[...] + jnp.sum(p, axis=-1, keepdims=True)
    pv = lax.dot_general(p.astype(v.dtype), v, (((2,), (1,)), ((0,), (0,))),
                         preferred_element_type=jnp.float32)         # (H, TQ, K)
    acc_scr[...] = alpha * acc_scr[...] + pv
    m_scr[...] = m_new

    # ---- finalize: deferred normalization + output projection (once per q tile).
    @pl.when(ki == nk - 1)
    def _finalize():
        inv_l = pl.reciprocal(l_scr[...], approx=True)               # EUP, (H, TQ, 1)
        z = acc_scr[...] * inv_l                                     # (H, TQ, K) f32
        n_heads = z.shape[0]
        out = jnp.zeros((z.shape[1], wo_ref.shape[-1]), jnp.float32)
        # Static per-head accumulate; leading-axis indexing only (no lane slicing),
        # and this runs once per query tile so it is amortized over all key steps.
        for h in range(n_heads):
            out = out + jnp.dot(z[h].astype(wo_ref.dtype), wo_ref[h],
                                preferred_element_type=jnp.float32)
        out_ref[0] = (out + ob_ref[...]).astype(out_ref.dtype)


def encoder_attention(x, Qs, Ks, Vs, O, Qbs, Kbs, Vbs, Ob,
                      *, block_q=None, block_k=None, vmem_limit_bytes=None):
    """EncoderAttention forward.  x: (B, P, D); weights as in the nn.Module."""
    B, P, D = x.shape
    H, _, K = Qs.shape
    cdtype = x.dtype
    scale = 1.0 / float(K) ** 0.5

    # --- hoisted projections: one XLA matmul each over the whole batch,
    # head-major layouts so the kernel indexes heads on a leading axis.
    q = ((jnp.einsum('bpd,hdk->bhpk', x, Qs) + Qbs[None, :, None, :]) * scale
         ).astype(cdtype)                                            # (B, H, P, K)
    k_t = (jnp.einsum('bpd,hdk->bhkp', x, Ks) + Kbs[None, :, :, None]
           ).astype(cdtype)                                          # (B, H, K, P)
    v = (jnp.einsum('bpd,hdk->bhpk', x, Vs) + Vbs[None, :, None, :]
         ).astype(cdtype)                                            # (B, H, P, K)
    wo = O.astype(cdtype)                                            # (H, K, D)
    ob = Ob.reshape(1, D).astype(cdtype)

    # --- tiling: 256-wide tiles by default (MXU-filling on v6e/v7x); short
    # sequences use a single full tile.  Non-divisible P -> pad + mask keys.
    DEF_TILE = 256
    tq = block_q if block_q is not None else (P if P <= DEF_TILE else DEF_TILE)
    tk = block_k if block_k is not None else (P if P <= DEF_TILE else DEF_TILE)
    pq = -(-P // tq) * tq        # padded query length (multiple of tq)
    pk = -(-P // tk) * tk        # padded key length   (multiple of tk)

    if pq != P:
        q = jnp.pad(q, ((0, 0), (0, 0), (0, pq - P), (0, 0)))
    if pk != P:
        k_t = jnp.pad(k_t, ((0, 0), (0, 0), (0, 0), (0, pk - P)))
        v = jnp.pad(v, ((0, 0), (0, 0), (0, pk - P), (0, 0)))

    nq = pq // tq
    nk = pk // tk
    need_mask = (pk != P)

    kernel = functools.partial(_flash_attn_kernel, seq_len=P, block_k=tk,
                               need_mask=need_mask)

    grid_spec = pltpu.PrefetchScalarGridSpec(
        num_scalar_prefetch=0,
        grid=(B, nq, nk),
        in_specs=[
            pl.BlockSpec((1, H, tq, K), lambda b, qi, ki: (b, 0, qi, 0)),  # q
            pl.BlockSpec((1, H, K, tk), lambda b, qi, ki: (b, 0, 0, ki)),  # k^T
            pl.BlockSpec((1, H, tk, K), lambda b, qi, ki: (b, 0, ki, 0)),  # v
            pl.BlockSpec((H, K, D), lambda b, qi, ki: (0, 0, 0)),          # O weights
            pl.BlockSpec((1, D), lambda b, qi, ki: (0, 0)),                # O bias
        ],
        out_specs=pl.BlockSpec((1, tq, D), lambda b, qi, ki: (b, qi, 0)),
        scratch_shapes=[
            pltpu.VMEM((H, tq, 1), jnp.float32),   # running max
            pltpu.VMEM((H, tq, 1), jnp.float32),   # running sum
            pltpu.VMEM((H, tq, K), jnp.float32),   # unnormalized output accumulator
        ],
    )

    cp_kwargs = dict(dimension_semantics=("parallel", "parallel", "arbitrary"))
    if vmem_limit_bytes is not None:
        cp_kwargs["vmem_limit_bytes"] = vmem_limit_bytes

    out = pl.pallas_call(
        kernel,
        out_shape=jax.ShapeDtypeStruct((B, pq, D), x.dtype),
        grid_spec=grid_spec,
        compiler_params=pltpu.CompilerParams(**cp_kwargs),
    )(q, k_t, v, wo, ob)

    if pq != P:
        out = out[:, :P, :]
    return out


def encoder_attention_ref(x, Qs, Ks, Vs, O, Qbs, Kbs, Vbs, Ob):
    """Plain-JAX reference mirroring the PyTorch forward exactly."""
    d_head = Qs.shape[-1]
    q = jnp.einsum('bpd,hdk->bphk', x, Qs) + Qbs
    k = jnp.einsum('bpd,hdk->bphk', x, Ks) + Kbs
    v = jnp.einsum('bpd,hdk->bphk', x, Vs) + Vbs
    scores = jnp.einsum('bqhk,bKhk->bhqK', q, k) / jnp.sqrt(jnp.float32(d_head))
    pattern = jax.nn.softmax(scores, axis=-1)
    z = jnp.einsum('bKhk,bhqK->bqhk', v, pattern)
    return jnp.einsum('bqhk,hkd->bqd', z, O) + Ob


if __name__ == "__main__":
    # Small config consistent with the module: d_model=32, n_heads=4, d_head=8.
    B, P, D, H, K = 2, 8, 32, 4, 8
    init_range = 0.02

    key = jax.random.PRNGKey(0)
    kx, kq_key, kk_key, kv_key, ko_key = jax.random.split(key, 5)

    x = jax.random.normal(kx, (B, P, D), dtype=jnp.float32)

    Qs = init_range * jax.random.normal(kq_key, (H, D, K), dtype=jnp.float32)
    Ks = init_range * jax.random.normal(kk_key, (H, D, K), dtype=jnp.float32)
    Vs = init_range * jax.random.normal(kv_key, (H, D, K), dtype=jnp.float32)
    O = init_range * jax.random.normal(ko_key, (H, K, D), dtype=jnp.float32)
    Qbs = jnp.zeros((H, K), dtype=jnp.float32)
    Kbs = jnp.zeros((H, K), dtype=jnp.float32)
    Vbs = jnp.zeros((H, K), dtype=jnp.float32)
    Ob = jnp.zeros((D,), dtype=jnp.float32)

    out = encoder_attention(x, Qs, Ks, Vs, O, Qbs, Kbs, Vbs, Ob)
    out = jax.block_until_ready(out)

    ref = encoder_attention_ref(x, Qs, Ks, Vs, O, Qbs, Kbs, Vbs, Ob)
    assert out.shape == (B, P, D)
    assert out.dtype == x.dtype
    err = jnp.max(jnp.abs(out - ref))
    assert jnp.allclose(out, ref, atol=2e-4, rtol=2e-3), f"max abs err = {err}"

    print("KERNEL_OK")
</pallas_src>

<mosaic_0001>
module attributes {stable_mosaic.version = 11 : i64} {
  func.func @_flash_attn_kernel(%arg0: i32, %arg1: i32, %arg2: i32, %arg3: memref<1x4x8x8xf32, #tpu.memory_space<vmem>>, %arg4: memref<1x4x8x8xf32, #tpu.memory_space<vmem>>, %arg5: memref<1x4x8x8xf32, #tpu.memory_space<vmem>>, %arg6: memref<4x8x32xf32, #tpu.memory_space<vmem>>, %arg7: memref<1x32xf32, #tpu.memory_space<vmem>>, %arg8: memref<1x8x32xf32, #tpu.memory_space<vmem>>, %arg9: memref<4x8x1xf32, #tpu.memory_space<vmem>>, %arg10: memref<4x8x1xf32, #tpu.memory_space<vmem>>, %arg11: memref<4x8x8xf32, #tpu.memory_space<vmem>>) attributes {dimension_semantics = [#tpu.dimension_semantics<parallel>, #tpu.dimension_semantics<parallel>, #tpu.dimension_semantics<arbitrary>], iteration_bounds = array<i64: 2, 1, 1>, scalar_prefetch = 0 : i64, scratch_operands = 3 : i64, tpu.core_type = #tpu.core_type<tc>, window_params = [{transform_indices = @transform_0, window_bounds = array<i64: 1, 4, 8, 8>}, {transform_indices = @transform_1, window_bounds = array<i64: 1, 4, 8, 8>}, {transform_indices = @transform_2, window_bounds = array<i64: 1, 4, 8, 8>}, {pipeline_mode = #tpu.pipeline_mode<synchronous>, transform_indices = @transform_3, window_bounds = array<i64: 4, 8, 32>}, {pipeline_mode = #tpu.pipeline_mode<synchronous>, transform_indices = @transform_4, window_bounds = array<i64: 1, 32>}, {transform_indices = @transform_5, window_bounds = array<i64: 1, 8, 32>}]} {
    %c0_i32 = arith.constant 0 : i32
    %0 = arith.cmpi eq, %arg2, %c0_i32 : i32
    %1 = arith.extui %0 : i1 to i32
    %c0_i32_0 = arith.constant 0 : i32
    %2 = arith.cmpi ne, %1, %c0_i32_0 : i32
    scf.if %2 {
      %cst_35 = arith.constant 0xFF800000 : f32
      %35 = vector.broadcast %cst_35 : f32 to vector<4x8x1xf32>
      %c0_36 = arith.constant 0 : index
      %c0_37 = arith.constant 0 : index
      %c0_38 = arith.constant 0 : index
      %36 = vector.load %arg9[%c0_36, %c0_37, %c0_38] : memref<4x8x1xf32, #tpu.memory_space<vmem>>, vector<4x8x1xf32>
      tpu.vector_store %arg9[%c0_36, %c0_37, %c0_38], %35 {strides = array<i32>} : memref<4x8x1xf32, #tpu.memory_space<vmem>>, vector<4x8x1xf32>,
      %cst_39 = arith.constant 0.000000e+00 : f32
      %37 = vector.broadcast %cst_39 : f32 to vector<4x8x1xf32>
      %c0_40 = arith.constant 0 : index
      %c0_41 = arith.constant 0 : index
      %c0_42 = arith.constant 0 : index
      %38 = vector.load %arg10[%c0_40, %c0_41, %c0_42] : memref<4x8x1xf32, #tpu.memory_space<vmem>>, vector<4x8x1xf32>
      tpu.vector_store %arg10[%c0_40, %c0_41, %c0_42], %37 {strides = array<i32>} : memref<4x8x1xf32, #tpu.memory_space<vmem>>, vector<4x8x1xf32>,
      %cst_43 = arith.constant 0.000000e+00 : f32
      %39 = vector.broadcast %cst_43 : f32 to vector<4x8x8xf32>
      %c0_44 = arith.constant 0 : index
      %c0_45 = arith.constant 0 : index
      %c0_46 = arith.constant 0 : index
      %40 = vector.load %arg11[%c0_44, %c0_45, %c0_46] : memref<4x8x8xf32, #tpu.memory_space<vmem>>, vector<4x8x8xf32>
      tpu.vector_store %arg11[%c0_44, %c0_45, %c0_46], %39 {strides = array<i32>} : memref<4x8x8xf32, #tpu.memory_space<vmem>>, vector<4x8x8xf32>,
    } else {
    }
    %c0 = arith.constant 0 : index
    %c0_1 = arith.constant 0 : index
    %c0_2 = arith.constant 0 : index
    %c0_3 = arith.constant 0 : index
    %3 = vector.load %arg3[%c0, %c0_1, %c0_2, %c0_3] : memref<1x4x8x8xf32, #tpu.memory_space<vmem>>, vector<1x4x8x8xf32>
    %4 = vector.shape_cast %3 : vector<1x4x8x8xf32> to vector<4x8x8xf32>
    %c0_4 = arith.constant 0 : index
    %c0_5 = arith.constant 0 : index
    %c0_6 = arith.constant 0 : index
    %c0_7 = arith.constant 0 : index
    %5 = vector.load %arg4[%c0_4, %c0_5, %c0_6, %c0_7] : memref<1x4x8x8xf32, #tpu.memory_space<vmem>>, vector<1x4x8x8xf32>
    %6 = vector.shape_cast %5 : vector<1x4x8x8xf32> to vector<4x8x8xf32>
    %c0_8 = arith.constant 0 : index
    %c0_9 = arith.constant 0 : index
    %c0_10 = arith.constant 0 : index
    %c0_11 = arith.constant 0 : index
    %7 = vector.load %arg5[%c0_8, %c0_9, %c0_10, %c0_11] : memref<1x4x8x8xf32, #tpu.memory_space<vmem>>, vector<1x4x8x8xf32>
    %8 = vector.shape_cast %7 : vector<1x4x8x8xf32> to vector<4x8x8xf32>
    %cst = arith.constant dense<0.000000e+00> : vector<4x8x8xf32>
    %9 = tpu.matmul %4, %6, %cst {dimension_numbers = #tpu.dot_dimension_numbers<[2], [1], [1], [2], [0, 0, 0, 1, 1, 2], [0], [0]>} : vector<4x8x8xf32>, vector<4x8x8xf32>, vector<4x8x8xf32> -> vector<4x8x8xf32>
    %c0_12 = arith.constant 0 : index
    %c0_13 = arith.constant 0 : index
    %c0_14 = arith.constant 0 : index
    %10 = vector.load %arg9[%c0_12, %c0_13, %c0_14] : memref<4x8x1xf32, #tpu.memory_space<vmem>>, vector<4x8x1xf32>
    %cst_15 = arith.constant dense<0xFF800000> : vector<4x8xf32>
    %11 = vector.multi_reduction <maximumf>, %9, %cst_15 [2] : vector<4x8x8xf32> to vector<4x8xf32>
    %12 = vector.shape_cast %11 : vector<4x8xf32> to vector<4x8x1xf32>
    %13 = arith.maximumf %10, %12 : vector<4x8x1xf32>
    %14 = arith.subf %10, %13 : vector<4x8x1xf32>
    %15 = math.exp %14 : vector<4x8x1xf32>
    %16 = vector.broadcast %13 : vector<4x8x1xf32> to vector<4x8x8xf32>
    %17 = arith.subf %9, %16 : vector<4x8x8xf32>
    %18 = math.exp %17 : vector<4x8x8xf32>
    %c0_16 = arith.constant 0 : index
    %c0_17 = arith.constant 0 : index
    %c0_18 = arith.constant 0 : index
    %19 = vector.load %arg10[%c0_16, %c0_17, %c0_18] : memref<4x8x1xf32, #tpu.memory_space<vmem>>, vector<4x8x1xf32>
    %20 = arith.mulf %15, %19 : vector<4x8x1xf32>
    %cst_19 = arith.constant dense<0.000000e+00> : vector<4x8xf32>
    %21 = vector.multi_reduction <add>, %18, %cst_19 [2] : vector<4x8x8xf32> to vector<4x8xf32>
    %22 = vector.shape_cast %21 : vector<4x8xf32> to vector<4x8x1xf32>
    %23 = arith.addf %20, %22 : vector<4x8x1xf32>
    %c0_20 = arith.constant 0 : index
    %c0_21 = arith.constant 0 : index
    %c0_22 = arith.constant 0 : index
    %24 = vector.load %arg10[%c0_20, %c0_21, %c0_22] : memref<4x8x1xf32, #tpu.memory_space<vmem>>, vector<4x8x1xf32>
    tpu.vector_store %arg10[%c0_20, %c0_21, %c0_22], %23 {strides = array<i32>} : memref<4x8x1xf32, #tpu.memory_space<vmem>>, vector<4x8x1xf32>,
    %cst_23 = arith.constant dense<0.000000e+00> : vector<4x8x8xf32>
    %25 = tpu.matmul %18, %8, %cst_23 {dimension_numbers = #tpu.dot_dimension_numbers<[2], [1], [1], [2], [0, 0, 0, 1, 1, 2], [0], [0]>} : vector<4x8x8xf32>, vector<4x8x8xf32>, vector<4x8x8xf32> -> vector<4x8x8xf32>
    %c0_24 = arith.constant 0 : index
    %c0_25 = arith.constant 0 : index
    %c0_26 = arith.constant 0 : index
    %26 = vector.load %arg11[%c0_24, %c0_25, %c0_26] : memref<4x8x8xf32, #tpu.memory_space<vmem>>, vector<4x8x8xf32>
    %27 = vector.broadcast %15 : vector<4x8x1xf32> to vector<4x8x8xf32>
    %28 = arith.mulf %27, %26 : vector<4x8x8xf32>
    %29 = arith.addf %28, %25 : vector<4x8x8xf32>
    %c0_27 = arith.constant 0 : index
    %c0_28 = arith.constant 0 : index
    %c0_29 = arith.constant 0 : index
    %30 = vector.load %arg11[%c0_27, %c0_28, %c0_29] : memref<4x8x8xf32, #tpu.memory_space<vmem>>, vector<4x8x8xf32>
    tpu.vector_store %arg11[%c0_27, %c0_28, %c0_29], %29 {strides = array<i32>} : memref<4x8x8xf32, #tpu.memory_space<vmem>>, vector<4x8x8xf32>,
    %c0_30 = arith.constant 0 : index
    %c0_31 = arith.constant 0 : index
    %c0_32 = arith.constant 0 : index
    %31 = vector.load %arg9[%c0_30, %c0_31, %c0_32] : memref<4x8x1xf32, #tpu.memory_space<vmem>>, vector<4x8x1xf32>
    tpu.vector_store %arg9[%c0_30, %c0_31, %c0_32], %13 {strides = array<i32>} : memref<4x8x1xf32, #tpu.memory_space<vmem>>, vector<4x8x1xf32>,
    %c0_i32_33 = arith.constant 0 : i32
    %32 = arith.cmpi eq, %arg2, %c0_i32_33 : i32
    %33 = arith.extui %32 : i1 to i32
    %c0_i32_34 = arith.constant 0 : i32
    %34 = arith.cmpi ne, %33, %c0_i32_34 : i32
    scf.if %34 {
      %c0_35 = arith.constant 0 : index
      %c0_36 = arith.constant 0 : index
      %c0_37 = arith.constant 0 : index
      %35 = vector.load %arg10[%c0_35, %c0_36, %c0_37] : memref<4x8x1xf32, #tpu.memory_space<vmem>>, vector<4x8x1xf32>
      %36 = tpu.reciprocal %35 {approx = true} : vector<4x8x1xf32> -> vector<4x8x1xf32>
      %c0_38 = arith.constant 0 : index
      %c0_39 = arith.constant 0 : index
      %c0_40 = arith.constant 0 : index
      %37 = vector.load %arg11[%c0_38, %c0_39, %c0_40] : memref<4x8x8xf32, #tpu.memory_space<vmem>>, vector<4x8x8xf32>
      %38 = vector.broadcast %36 : vector<4x8x1xf32> to vector<4x8x8xf32>
      %39 = arith.mulf %37, %38 : vector<4x8x8xf32>
      %cst_41 = arith.constant 0.000000e+00 : f32
      %40 = vector.broadcast %cst_41 : f32 to vector<8x32xf32>
      %41 = vector.extract_strided_slice %39 {offsets = [0, 0, 0], sizes = [1, 8, 8], strides = [1, 1, 1]} : vector<4x8x8xf32> to vector<1x8x8xf32>
      %42 = vector.shape_cast %41 : vector<1x8x8xf32> to vector<8x8xf32>
      %c0_42 = arith.constant 0 : index
      %c0_43 = arith.constant 0 : index
      %c0_44 = arith.constant 0 : index
      %43 = vector.load %arg6[%c0_42, %c0_43, %c0_44] : memref<4x8x32xf32, #tpu.memory_space<vmem>>, vector<1x8x32xf32>
      %44 = vector.shape_cast %43 : vector<1x8x32xf32> to vector<8x32xf32>
      %cst_45 = arith.constant dense<0.000000e+00> : vector<8x32xf32>
      %45 = tpu.matmul %42, %44, %cst_45 {dimension_numbers = #tpu.dot_dimension_numbers<[1], [0], [0], [1], [0, 0, 1, 1], [], []>} : vector<8x8xf32>, vector<8x32xf32>, vector<8x32xf32> -> vector<8x32xf32>
      %46 = arith.addf %40, %45 : vector<8x32xf32>
      %47 = vector.extract_strided_slice %39 {offsets = [1, 0, 0], sizes = [1, 8, 8], strides = [1, 1, 1]} : vector<4x8x8xf32> to vector<1x8x8xf32>
      %48 = vector.shape_cast %47 : vector<1x8x8xf32> to vector<8x8xf32>
      %c1 = arith.constant 1 : index
      %c0_46 = arith.constant 0 : index
      %c0_47 = arith.constant 0 : index
      %49 = vector.load %arg6[%c1, %c0_46, %c0_47] : memref<4x8x32xf32, #tpu.memory_space<vmem>>, vector<1x8x32xf32>
      %50 = vector.shape_cast %49 : vector<1x8x32xf32> to vector<8x32xf32>
      %cst_48 = arith.constant dense<0.000000e+00> : vector<8x32xf32>
      %51 = tpu.matmul %48, %50, %cst_48 {dimension_numbers = #tpu.dot_dimension_numbers<[1], [0], [0], [1], [0, 0, 1, 1], [], []>} : vector<8x8xf32>, vector<8x32xf32>, vector<8x32xf32> -> vector<8x32xf32>
      %52 = arith.addf %46, %51 : vector<8x32xf32>
      %53 = vector.extract_strided_slice %39 {offsets = [2, 0, 0], sizes = [1, 8, 8], strides = [1, 1, 1]} : vector<4x8x8xf32> to vector<1x8x8xf32>
      %54 = vector.shape_cast %53 : vector<1x8x8xf32> to vector<8x8xf32>
      %c2 = arith.constant 2 : index
      %c0_49 = arith.constant 0 : index
      %c0_50 = arith.constant 0 : index
      %55 = vector.load %arg6[%c2, %c0_49, %c0_50] : memref<4x8x32xf32, #tpu.memory_space<vmem>>, vector<1x8x32xf32>
      %56 = vector.shape_cast %55 : vector<1x8x32xf32> to vector<8x32xf32>
      %cst_51 = arith.constant dense<0.000000e+00> : vector<8x32xf32>
      %57 = tpu.matmul %54, %56, %cst_51 {dimension_numbers = #tpu.dot_dimension_numbers<[1], [0], [0], [1], [0, 0, 1, 1], [], []>} : vector<8x8xf32>, vector<8x32xf32>, vector<8x32xf32> -> vector<8x32xf32>
      %58 = arith.addf %52, %57 : vector<8x32xf32>
      %59 = vector.extract_strided_slice %39 {offsets = [3, 0, 0], sizes = [1, 8, 8], strides = [1, 1, 1]} : vector<4x8x8xf32> to vector<1x8x8xf32>
      %60 = vector.shape_cast %59 : vector<1x8x8xf32> to vector<8x8xf32>
      %c3 = arith.constant 3 : index
      %c0_52 = arith.constant 0 : index
      %c0_53 = arith.constant 0 : index
      %61 = vector.load %arg6[%c3, %c0_52, %c0_53] : memref<4x8x32xf32, #tpu.memory_space<vmem>>, vector<1x8x32xf32>
      %62 = vector.shape_cast %61 : vector<1x8x32xf32> to vector<8x32xf32>
      %cst_54 = arith.constant dense<0.000000e+00> : vector<8x32xf32>
      %63 = tpu.matmul %60, %62, %cst_54 {dimension_numbers = #tpu.dot_dimension_numbers<[1], [0], [0], [1], [0, 0, 1, 1], [], []>} : vector<8x8xf32>, vector<8x32xf32>, vector<8x32xf32> -> vector<8x32xf32>
      %64 = arith.addf %58, %63 : vector<8x32xf32>
      %c0_55 = arith.constant 0 : index
      %c0_56 = arith.constant 0 : index
      %65 = vector.load %arg7[%c0_55, %c0_56] : memref<1x32xf32, #tpu.memory_space<vmem>>, vector<1x32xf32>
      %66 = vector.broadcast %65 : vector<1x32xf32> to vector<8x32xf32>
      %67 = arith.addf %64, %66 : vector<8x32xf32>
      %c0_57 = arith.constant 0 : index
      %c0_58 = arith.constant 0 : index
      %c0_59 = arith.constant 0 : index
      %68 = vector.load %arg8[%c0_57, %c0_58, %c0_59] : memref<1x8x32xf32, #tpu.memory_space<vmem>>, vector<1x8x32xf32>
      %69 = vector.shape_cast %68 : vector<1x8x32xf32> to vector<8x32xf32>
      %70 = vector.shape_cast %67 : vector<8x32xf32> to vector<1x8x32xf32>
      tpu.vector_store %arg8[%c0_57, %c0_58, %c0_59], %70 {strides = array<i32>} : memref<1x8x32xf32, #tpu.memory_space<vmem>>, vector<1x8x32xf32>,
    } else {
    }
    return
  }
  func.func @transform_0(%arg0: i32, %arg1: i32, %arg2: i32) -> (i32, i32, i32, i32) {
    %c0_i32 = arith.constant 0 : i32
    %c0_i32_0 = arith.constant 0 : i32
    %c0_i32_1 = arith.constant 0 : i32
    return %arg0, %c0_i32, %arg1, %c0_i32_0 : i32, i32, i32, i32
  }
  func.func @transform_1(%arg0: i32, %arg1: i32, %arg2: i32) -> (i32, i32, i32, i32) {
    %c0_i32 = arith.constant 0 : i32
    %c0_i32_0 = arith.constant 0 : i32
    %c0_i32_1 = arith.constant 0 : i32
    return %arg0, %c0_i32, %c0_i32_0, %arg2 : i32, i32, i32, i32
  }
  func.func @transform_2(%arg0: i32, %arg1: i32, %arg2: i32) -> (i32, i32, i32, i32) {
    %c0_i32 = arith.constant 0 : i32
    %c0_i32_0 = arith.constant 0 : i32
    %c0_i32_1 = arith.constant 0 : i32
    return %arg0, %c0_i32, %arg2, %c0_i32_0 : i32, i32, i32, i32
  }
  func.func @transform_3(%arg0: i32, %arg1: i32, %arg2: i32) -> (i32, i32, i32) {
    %c0_i32 = arith.constant 0 : i32
    %c0_i32_0 = arith.constant 0 : i32
    %c0_i32_1 = arith.constant 0 : i32
    %c0_i32_2 = arith.constant 0 : i32
    return %c0_i32, %c0_i32_0, %c0_i32_1 : i32, i32, i32
  }
  func.func @transform_4(%arg0: i32, %arg1: i32, %arg2: i32) -> (i32, i32) {
    %c0_i32 = arith.constant 0 : i32
    %c0_i32_0 = arith.constant 0 : i32
    %c0_i32_1 = arith.constant 0 : i32
    return %c0_i32, %c0_i32_0 : i32, i32
  }
  func.func @transform_5(%arg0: i32, %arg1: i32, %arg2: i32) -> (i32, i32, i32) {
    %c0_i32 = arith.constant 0 : i32
    %c0_i32_0 = arith.constant 0 : i32
    return %arg0, %arg1, %c0_i32 : i32, i32, i32
  }
}

</mosaic_0001>

<llo_original>
// kernel: tpu_custom_call.1
$region0: #{tpu_custom_call.1}
  #allocation0 [shape = 'u32[]', space=smem, size = 0x4, offset = 0x4, fixed_abs, tag = 'smem constant byte address 0x4 - core index']
  #allocation1 [shape = 'u32[72,128]{1,0:T(1,128)}', space=vmem, size = 0x9000, scoped, tag = 'internal scratch']
  #allocation2 [shape = 'f32[4,8,1]{2,1,0:T(8,128)}', space=vmem, size = 0x4000, scoped, tag = 'scratch operand']
  #allocation3 [shape = 'f32[4,8,1]{2,1,0:T(8,128)}', space=vmem, size = 0x4000, scoped, tag = 'scratch operand']
  #allocation4 [shape = 'f32[4,8,8]{2,1,0:T(8,128)}', space=vmem, size = 0x4000, scoped, tag = 'scratch operand']
  %s0 = inlined_call_operand.hbm [shape: f32[2,4,8,8], index: 0, kind: input, shape index: {}]
  %s1 = inlined_call_operand.hbm [shape: f32[2,4,8,8], index: 1, kind: input, shape index: {}]
  %s2 = inlined_call_operand.hbm [shape: f32[2,4,8,8], index: 2, kind: input, shape index: {}]
  %s3 = inlined_call_operand.hbm [shape: f32[4,8,32], index: 3, kind: input, shape index: {}]
  %s4 = inlined_call_operand.vmem [shape: f32[1,32], index: 4, kind: input, shape index: {}]
  %s5 = inlined_call_operand.hbm [shape: f32[2,8,32], index: 5, kind: output, shape index: {}]
  %s6 = sld [smem:[#allocation0]]
  $region77: #{tpu_custom_call.1} parent=0
    _
  %s8 = ssub.s32 1, %s6
  %s9 = scalar_select 0, %s8, %s6
  $region1: #{tpu_custom_call.1} parent=0
    #allocation5 [shape = 'u8[32768]{0}', space=vmem, size = 0x8000, scoped, tag = 'input window, operand 0']
    #allocation6 [shape = 's32[2]{0}', space=sflag, size = 0x8, scoped, tag = 'scoped memory for tpu_custom_call.1']
    #allocation7 [shape = 's32[2]{0}', space=sflag, size = 0x8, scoped, tag = 'scoped memory for tpu_custom_call.1']
    #allocation8 [shape = 'u8[32768]{0}', space=vmem, size = 0x8000, scoped, tag = 'input window, operand 1']
    #allocation9 [shape = 's32[2]{0}', space=sflag, size = 0x8, scoped, tag = 'scoped memory for tpu_custom_call.1']
    #allocation10 [shape = 'u8[32768]{0}', space=vmem, size = 0x8000, scoped, tag = 'input window, operand 2']
    #allocation11 [shape = 'u8[16384]{0}', space=vmem, size = 0x4000, scoped, tag = 'input window, operand 3, single buffered']
    #allocation12 [shape = 's32[1]{0}', space=sflag, size = 0x4, scoped, tag = 'scoped memory for tpu_custom_call.1']
    #allocation13 [shape = 'u8[8192]{0}', space=vmem, size = 0x2000, scoped, tag = 'output window, operand 0']
    %10 = vsyncpa [#allocation6], 0
    %s11 = scalar_lea.sflag [#allocation6], 1
    %12 = vsyncpa %s11, 0
    %13 = vsyncpa [#allocation9], 0
    %s14 = scalar_lea.sflag [#allocation9], 1
    %15 = vsyncpa %s14, 0
    %16 = vsyncpa [#allocation12], 0
    %17 = vsyncpa [#allocation7], 0
    %s18 = scalar_lea.sflag [#allocation7], 1
    %19 = vsyncpa %s18, 0
    loop: start=0, step=1, limit=4
    $region2: #{tpu_custom_call.1} parent=1 // loop_pre_header
      _
    $region3: #{tpu_custom_call.1} parent=1 // loop_header
      %s21 = sphi 0, %s25
      %p22 = scmp.ge.s32.totalorder %s21, 4
      %s28 = sphi 0, %s47
      %s29 = sphi 0, %s43
      %s30 = sphi 0, %s39
      %s31 = sphi 0, %s28
      %s32 = sphi 0, %s29
      %s33 = sphi 0, %s30
      %s34 = sphi 0, %s31
      %s35 = sphi 0, %s32
      %s36 = sphi 0, %s33
      %s52 = sphi 0, %s54
      %s55 = sphi 0, %s52
      %s56 = sphi 0, %s55
      %s72 = sphi 0, %s56
      %s80 = sphi 0, %s82
      %s83 = sphi 0, %s80
      %s84 = sphi 0, %s83
      %s100 = sphi 0, %s84
      %s108 = sphi 0, %s110
      %s111 = sphi 0, %s108
      %s112 = sphi 0, %s111
      %s128 = sphi 0, %s112
      %s132 = sphi 0, %s132
      %s134 = sphi 0, %s132
      %s135 = sphi 0, %s134
      %s149 = sphi 0, %s135
      %s153 = sphi 0, %s153
      %s155 = sphi 0, %s153
      %s156 = sphi 0, %s155
      %s170 = sphi 0, %s156
      %s178 = sphi 0, %s180
      %s181 = sphi 0, %s178
      %s182 = sphi 0, %s181
      %s198 = sphi 0, %s182
    $region4: #{tpu_custom_call.1} parent=1 // loop_header_branch
      %24 = sbr.rel (%p22) target = $region8
    $region5: #{tpu_custom_call.1} parent=1 // loop_body
      %s26 = ssub.s32 %s21, 1
      %s27 = ssub.s32 %s21, 2
      %s37 = sadd.s32 1, %s30
      %p38 = scmp.ge.s32.totalorder %s37, 1
      %s39 = scalar_select %p38, 0, %s37
      %s40 = sadd.s32 1, %s29
      %s41 = scalar_select %p38, %s40, %s29
      %p42 = scmp.ge.s32.totalorder %s41, 1
      %s43 = scalar_select %p42, 0, %s41
      %s44 = sadd.s32 1, %s28
      %s45 = scalar_select %p42, %s44, %s28
      %p46 = scmp.ge.s32.totalorder %s45, 2
      %s47 = scalar_select %p46, 0, %s45
      %s48 = ssub.s32 %s28, %s47
      %s49 = ssub.s32 %s29, %s43
      %s50 = sor.u32 %s48, %s49
      %p51 = scmp.eq.s32.totalorder %s50, 0
      %s53 = sadd.s32 %s52, 1
      %s54 = scalar_select %p51, %s52, %s53
      %p57 = pneg %p51
      %p58 = scmp.eq.s32.totalorder %s21, 1
      %p59 = por %p57, %p58
      %p60 = scmp.ne.s32.totalorder %s52, %s55
      %p61 = scmp.eq.s32.totalorder %s21, 0
      %p62 = por %p60, %p61
      %p63 = scmp.ne.s32.totalorder %s52, %s55
      %p64 = scmp.eq.s32.totalorder %s26, 1
      %p65 = por %p63, %p64
      %p66 = scmp.ne.s32.totalorder %s55, %s56
      %p67 = scmp.eq.s32.totalorder %s26, 0
      %p68 = por %p66, %p67
      %p69 = scmp.ne.s32.totalorder %s55, %s56
      %p70 = scmp.eq.s32.totalorder %s27, 1
      %p71 = por %p69, %p70
      %p73 = scmp.ne.s32.totalorder %s56, %s72
      %p74 = scmp.eq.s32.totalorder %s27, 0
      %p75 = por %p73, %p74
      %s76 = ssub.s32 %s28, %s47
      %s77 = ssub.s32 %s30, %s39
      %s78 = sor.u32 %s76, %s77
      %p79 = scmp.eq.s32.totalorder %s78, 0
      %s81 = sadd.s32 %s80, 1
      %s82 = scalar_select %p79, %s80, %s81
      %p85 = pneg %p79
      %p86 = scmp.eq.s32.totalorder %s21, 1
      %p87 = por %p85, %p86
      %p88 = scmp.ne.s32.totalorder %s80, %s83
      %p89 = scmp.eq.s32.totalorder %s21, 0
      %p90 = por %p88, %p89
      %p91 = scmp.ne.s32.totalorder %s80, %s83
      %p92 = scmp.eq.s32.totalorder %s26, 1
      %p93 = por %p91, %p92
      %p94 = scmp.ne.s32.totalorder %s83, %s84
      %p95 = scmp.eq.s32.totalorder %s26, 0
      %p96 = por %p94, %p95
      %p97 = scmp.ne.s32.totalorder %s83, %s84
      %p98 = scmp.eq.s32.totalorder %s27, 1
      %p99 = por %p97, %p98
      %p101 = scmp.ne.s32.totalorder %s84, %s100
      %p102 = scmp.eq.s32.totalorder %s27, 0
      %p103 = por %p101, %p102
      %s104 = ssub.s32 %s28, %s47
      %s105 = ssub.s32 %s30, %s39
      %s106 = sor.u32 %s104, %s105
      %p107 = scmp.eq.s32.totalorder %s106, 0
      %s109 = sadd.s32 %s108, 1
      %s110 = scalar_select %p107, %s108, %s109
      %p113 = pneg %p107
      %p114 = scmp.eq.s32.totalorder %s21, 1
      %p115 = por %p113, %p114
      %p116 = scmp.ne.s32.totalorder %s108, %s111
      %p117 = scmp.eq.s32.totalorder %s21, 0
      %p118 = por %p116, %p117
      %p119 = scmp.ne.s32.totalorder %s108, %s111
      %p120 = scmp.eq.s32.totalorder %s26, 1
      %p121 = por %p119, %p120
      %p122 = scmp.ne.s32.totalorder %s111, %s112
      %p123 = scmp.eq.s32.totalorder %s26, 0
      %p124 = por %p122, %p123
      %p125 = scmp.ne.s32.totalorder %s111, %s112
      %p126 = scmp.eq.s32.totalorder %s27, 1
      %p127 = por %p125, %p126
      %p129 = scmp.ne.s32.totalorder %s112, %s128
      %p130 = scmp.eq.s32.totalorder %s27, 0
      %p131 = por %p129, %p130
      %s133 = sadd.s32 %s132, 1
      %p136 = scmp.eq.s32.totalorder %s21, 1
      %p137 = scmp.ne.s32.totalorder %s132, %s134
      %p138 = scmp.eq.s32.totalorder %s21, 0
      %p139 = por %p137, %p138
      %p140 = scmp.ne.s32.totalorder %s132, %s134
      %p141 = scmp.eq.s32.totalorder %s26, 1
      %p142 = por %p140, %p141
      %p143 = scmp.ne.s32.totalorder %s134, %s135
      %p144 = scmp.eq.s32.totalorder %s26, 0
      %p145 = por %p143, %p144
      %p146 = scmp.ne.s32.totalorder %s134, %s135
      %p147 = scmp.eq.s32.totalorder %s27, 1
      %p148 = por %p146, %p147
      %p150 = scmp.ne.s32.totalorder %s135, %s149
      %p151 = scmp.eq.s32.totalorder %s27, 0
      %p152 = por %p150, %p151
      %s154 = sadd.s32 %s153, 1
      %p157 = scmp.eq.s32.totalorder %s21, 1
      %p158 = scmp.ne.s32.totalorder %s153, %s155
      %p159 = scmp.eq.s32.totalorder %s21, 0
      %p160 = por %p158, %p159
      %p161 = scmp.ne.s32.totalorder %s153, %s155
      %p162 = scmp.eq.s32.totalorder %s26, 1
      %p163 = por %p161, %p162
      %p164 = scmp.ne.s32.totalorder %s155, %s156
      %p165 = scmp.eq.s32.totalorder %s26, 0
      %p166 = por %p164, %p165
      %p167 = scmp.ne.s32.totalorder %s155, %s156
      %p168 = scmp.eq.s32.totalorder %s27, 1
      %p169 = por %p167, %p168
      %p171 = scmp.ne.s32.totalorder %s156, %s170
      %p172 = scmp.eq.s32.totalorder %s27, 0
      %p173 = por %p171, %p172
      %s174 = ssub.s32 %s28, %s47
      %s175 = ssub.s32 %s29, %s43
      %s176 = sor.u32 %s174, %s175
      %p177 = scmp.eq.s32.totalorder %s176, 0
      %s179 = sadd.s32 %s178, 1
      %s180 = scalar_select %p177, %s178, %s179
      %p183 = pneg %p177
      %p184 = scmp.eq.s32.totalorder %s21, 1
      %p185 = por %p183, %p184
      %p186 = scmp.ne.s32.totalorder %s178, %s181
      %p187 = scmp.eq.s32.totalorder %s21, 0
      %p188 = por %p186, %p187
      %p189 = scmp.ne.s32.totalorder %s178, %s181
      %p190 = scmp.eq.s32.totalorder %s26, 1
      %p191 = por %p189, %p190
      %p192 = scmp.ne.s32.totalorder %s181, %s182
      %p193 = scmp.eq.s32.totalorder %s26, 0
      %p194 = por %p192, %p193
      %p195 = scmp.ne.s32.totalorder %s181, %s182
      %p196 = scmp.eq.s32.totalorder %s27, 1
      %p197 = por %p195, %p196
      %p199 = scmp.ne.s32.totalorder %s182, %s198
      %p200 = scmp.eq.s32.totalorder %s27, 0
      %p201 = por %p199, %p200
      %p202 = scmp.le.s32.totalorder 1, %s21
      %p203 = scmp.lt.s32.totalorder %s21, 3
      %p204 = pnand %p202, %p203
      %p205 = pneg %p204
      // Predicated region
      $region9: #{tpu_custom_call.1} parent=5 // pred_check
        _
      $region10: #{tpu_custom_call.1} parent=5 // pred_check_branch
        %207 = sbr.rel (%p204) target = $region12
      $region11: #{tpu_custom_call.1} parent=5 // pred_region
        %s208 = ssub.s32 %s21, 1
        // Predicated region
        $region13: #{tpu_custom_call.1} parent=11 // pred_check
          %p209 = pneg %p145
        $region14: #{tpu_custom_call.1} parent=11 // pred_check_branch
          %211 = sbr.rel (%p209) target = $region16
        $region15: #{tpu_custom_call.1} parent=11 // pred_region
          %213 = vsyncadd [#allocation12], 0
          %s214 = sshll.u32 %s3, 4
          %s215 = int_to_ptr.hbm [resolvable:$true] %s214
          %s216 = sshll.u32 [#allocation11], 4
          %s217 = int_to_ptr.vmem [resolvable:$true] %s216
          %222 = dma.hbm_to_vmem [thread:$0]  %s215, 512, %s217, [#allocation12], 128, 128, 8
        $region16: #{tpu_custom_call.1} parent=11 // pred_fallthru
          _
        // Predicated region
        $region17: #{tpu_custom_call.1} parent=11 // pred_check
          %p223 = pneg %p166
        $region18: #{tpu_custom_call.1} parent=11 // pred_check_branch
          %225 = sbr.rel (%p223) target = $region20
        $region19: #{tpu_custom_call.1} parent=11 // pred_region
          _
        $region20: #{tpu_custom_call.1} parent=11 // pred_fallthru
          _
      $region12: #{tpu_custom_call.1} parent=5 // pred_fallthru
        _
      %p226 = scmp.lt.s32.totalorder %s21, 2
      // Predicated region
      $region21: #{tpu_custom_call.1} parent=5 // pred_check
        %p227 = pneg %p226
      $region22: #{tpu_custom_call.1} parent=5 // pred_check_branch
        %229 = sbr.rel (%p227) target = $region24
      $region23: #{tpu_custom_call.1} parent=5 // pred_region
        // Predicated region
        $region25: #{tpu_custom_call.1} parent=23 // pred_check
          %p230 = pneg %p62
        $region26: #{tpu_custom_call.1} parent=23 // pred_check_branch
          %232 = sbr.rel (%p230) target = $region28
        $region27: #{tpu_custom_call.1} parent=23 // pred_region
          %s233 = sand.u32 %s52, 1
          %s234 = scalar_lea.sflag [#allocation6], %s233
          %s235 = sand.u32 %s52, 1
          %s236 = smul.addr %s235, 32
          %s237 = scalar_lea.vmem [#allocation5], %s236
          %239 = vsyncadd %s234, 0
          %s240 = smul.addr %s28, 4
          %s241 = sadd.s32 %s29, %s240
          %s242 = smul.addr %s241, 8
          %s243 = scalar_lea.hbm %s0, %s242
          %s244 = sshll.u32 %s243, 4
          %s245 = int_to_ptr.hbm [resolvable:$true] %s244
          %s246 = sshll.u32 %s237, 4
          %s247 = int_to_ptr.vmem [resolvable:$true] %s246
          %252 = dma.hbm_to_vmem [thread:$0]  %s245, 512, %s247, %s234, 128, 128, 8
        $region28: #{tpu_custom_call.1} parent=23 // pred_fallthru
          _
        // Predicated region
        $region29: #{tpu_custom_call.1} parent=23 // pred_check
          %p253 = pneg %p90
        $region30: #{tpu_custom_call.1} parent=23 // pred_check_branch
          %255 = sbr.rel (%p253) target = $region32
        $region31: #{tpu_custom_call.1} parent=23 // pred_region
          %s256 = sand.u32 %s21, 1
          %s257 = scalar_lea.sflag [#allocation9], %s256
          %s258 = sand.u32 %s80, 1
          %s259 = smul.addr %s258, 32
          %s260 = scalar_lea.vmem [#allocation8], %s259
          %262 = vsyncadd %s257, 0
          %s263 = smul.addr %s28, 4
          %s264 = sadd.s32 %s30, %s263
          %s265 = smul.addr %s264, 8
          %s266 = scalar_lea.hbm %s1, %s265
          %s267 = sshll.u32 %s266, 4
          %s268 = int_to_ptr.hbm [resolvable:$true] %s267
          %s269 = sshll.u32 %s260, 4
          %s270 = int_to_ptr.vmem [resolvable:$true] %s269
          %275 = dma.hbm_to_vmem [thread:$0]  %s268, 512, %s270, %s257, 128, 128, 8
        $region32: #{tpu_custom_call.1} parent=23 // pred_fallthru
          _
        // Predicated region
        $region33: #{tpu_custom_call.1} parent=23 // pred_check
          %p276 = pneg %p118
        $region34: #{tpu_custom_call.1} parent=23 // pred_check_branch
          %278 = sbr.rel (%p276) target = $region36
        $region35: #{tpu_custom_call.1} parent=23 // pred_region
          %s279 = sand.u32 %s21, 1
          %s280 = scalar_lea.sflag [#allocation9], %s279
          %s281 = sand.u32 %s108, 1
          %s282 = smul.addr %s281, 32
          %s283 = scalar_lea.vmem [#allocation10], %s282
          %285 = vsyncadd %s280, 0
          %s286 = smul.addr %s28, 4
          %s287 = sadd.s32 %s30, %s286
          %s288 = smul.addr %s287, 8
          %s289 = scalar_lea.hbm %s2, %s288
          %s290 = sshll.u32 %s289, 4
          %s291 = int_to_ptr.hbm [resolvable:$true] %s290
          %s292 = sshll.u32 %s283, 4
          %s293 = int_to_ptr.vmem [resolvable:$true] %s292
          %298 = dma.hbm_to_vmem [thread:$0]  %s291, 512, %s293, %s280, 128, 128, 8
        $region36: #{tpu_custom_call.1} parent=23 // pred_fallthru
          _
      $region24: #{tpu_custom_call.1} parent=5 // pred_fallthru
        _
      %p299 = scmp.le.s32.totalorder 1, %s21
      %p300 = scmp.lt.s32.totalorder %s21, 3
      %p301 = pnand %p299, %p300
      %p302 = pneg %p301
      // Predicated region
      $region37: #{tpu_custom_call.1} parent=5 // pred_check
        _
      $region38: #{tpu_custom_call.1} parent=5 // pred_check_branch
        %304 = sbr.rel (%p301) target = $region40
      $region39: #{tpu_custom_call.1} parent=5 // pred_region
        %s305 = ssub.s32 %s21, 1
        %s306 = sand.u32 %s55, 1
        %s307 = scalar_lea.sflag [#allocation6], %s306
        %s308 = sand.u32 %s55, 1
        %s309 = smul.addr %s308, 32
        %s310 = scalar_lea.vmem [#allocation5], %s309
        // Predicated region
        $region41: #{tpu_custom_call.1} parent=39 // pred_check
          %p311 = pneg %p68
        $region42: #{tpu_custom_call.1} parent=39 // pred_check_branch
          %313 = sbr.rel (%p311) target = $region44
        $region43: #{tpu_custom_call.1} parent=39 // pred_region
          %315 = dma.done %s307, 512
        $region44: #{tpu_custom_call.1} parent=39 // pred_fallthru
          _
        %s316 = sand.u32 %s26, 1
        %s317 = scalar_lea.sflag [#allocation9], %s316
        %s318 = sand.u32 %s83, 1
        %s319 = smul.addr %s318, 32
        %s320 = scalar_lea.vmem [#allocation8], %s319
        // Predicated region
        $region45: #{tpu_custom_call.1} parent=39 // pred_check
          %p321 = pneg %p96
        $region46: #{tpu_custom_call.1} parent=39 // pred_check_branch
          %323 = sbr.rel (%p321) target = $region48
        $region47: #{tpu_custom_call.1} parent=39 // pred_region
          %325 = dma.done %s317, 512
        $region48: #{tpu_custom_call.1} parent=39 // pred_fallthru
          _
        %s326 = sand.u32 %s26, 1
        %s327 = scalar_lea.sflag [#allocation9], %s326
        %s328 = sand.u32 %s111, 1
        %s329 = smul.addr %s328, 32
        %s330 = scalar_lea.vmem [#allocation10], %s329
        // Predicated region
        $region49: #{tpu_custom_call.1} parent=39 // pred_check
          %p331 = pneg %p124
        $region50: #{tpu_custom_call.1} parent=39 // pred_check_branch
          %333 = sbr.rel (%p331) target = $region52
        $region51: #{tpu_custom_call.1} parent=39 // pred_region
          %335 = dma.done %s327, 512
        $region52: #{tpu_custom_call.1} parent=39 // pred_fallthru
          _
        // Predicated region
        $region53: #{tpu_custom_call.1} parent=39 // pred_check
          %p336 = pneg %p145
        $region54: #{tpu_custom_call.1} parent=39 // pred_check_branch
          %338 = sbr.rel (%p336) target = $region56
        $region55: #{tpu_custom_call.1} parent=39 // pred_region
          %340 = dma.done [#allocation12], 512
        $region56: #{tpu_custom_call.1} parent=39 // pred_fallthru
          _
        %s341 = sand.u32 %s55, 1
        %s342 = scalar_lea.sflag [#allocation6], %s341
        %s343 = sand.u32 %s55, 1
        %s344 = smul.addr %s343, 32
        %s345 = scalar_lea.vmem [#allocation5], %s344
        %p346 = pneg %p68
        %p347 = pneg %p65
        %s348 = sand.u32 %s26, 1
        %s349 = scalar_lea.sflag [#allocation9], %s348
        %s350 = sand.u32 %s83, 1
        %s351 = smul.addr %s350, 32
        %s352 = scalar_lea.vmem [#allocation8], %s351
        %p353 = pneg %p96
        %p354 = pneg %p93
        %s355 = sand.u32 %s26, 1
        %s356 = scalar_lea.sflag [#allocation9], %s355
        %s357 = sand.u32 %s111, 1
        %s358 = smul.addr %s357, 32
        %s359 = scalar_lea.vmem [#allocation10], %s358
        %p360 = pneg %p124
        %p361 = pneg %p121
        %p362 = pneg %p145
        %p363 = pneg %p142
        %p364 = pneg %p166
        %p365 = pneg %p163
        %p366 = pneg %p194
        %p367 = pneg %p191
        %s368 = sand.u32 %s181, 1
        %s369 = scalar_lea.sflag [#allocation7], %s368
        %s370 = sand.u32 %s181, 1
        %s371 = smul.addr %s370, 8
        %s372 = scalar_lea.vmem [#allocation13], %s371
        %p373 = scmp.eq.s32.totalorder %s33, 0
        // Predicated region
        $region57: #{tpu_custom_call.1} parent=39 // pred_check
          %p374 = pneg %p373
        $region58: #{tpu_custom_call.1} parent=39 // pred_check_branch
          %376 = sbr.rel (%p374) target = $region60
        $region59: #{tpu_custom_call.1} parent=39 // pred_region
          %vm377 = vcmask 7168
          %378 = vst.msk [vmem:[#allocation2] sm:$0xff] %vm377, -inf
          %379 = vst.msk [vmem:[#allocation2 + $0x8] sm:$0xff] %vm377, -inf
          %380 = vst.msk [vmem:[#allocation2 + $0x10] sm:$0xff] %vm377, -inf
          %381 = vst.msk [vmem:[#allocation2 + $0x18] sm:$0xff] %vm377, -inf
          %382 = vst.msk [vmem:[#allocation3] sm:$0xff] %vm377, 0.0
          %383 = vst.msk [vmem:[#allocation3 + $0x8] sm:$0xff] %vm377, 0.0
          %384 = vst.msk [vmem:[#allocation3 + $0x10] sm:$0xff] %vm377, 0.0
          %385 = vst.msk [vmem:[#allocation3 + $0x18] sm:$0xff] %vm377, 0.0
          %vm386 = vcmask 64512
          %387 = vst.msk [vmem:[#allocation4] sm:$0xff] %vm386, 0.0
          %388 = vst.msk [vmem:[#allocation4 + $0x8] sm:$0xff] %vm386, 0.0
          %389 = vst.msk [vmem:[#allocation4 + $0x10] sm:$0xff] %vm386, 0.0
          %390 = vst.msk [vmem:[#allocation4 + $0x18] sm:$0xff] %vm386, 0.0
        $region60: #{tpu_custom_call.1} parent=39 // pred_fallthru
          _
        %v391 = vld [vmem:[%s310] sm:$0xff]
        %v392 = vld [vmem:[%s310 + $0x8] sm:$0xff]
        %v393 = vld [vmem:[%s310 + $0x10] sm:$0xff]
        %v394 = vld [vmem:[%s310 + $0x18] sm:$0xff]
        %v395 = vld [vmem:[%s320] sm:$0xff]
        %v396 = vld [vmem:[%s320 + $0x8] sm:$0xff]
        %v397 = vld [vmem:[%s320 + $0x10] sm:$0xff]
        %v398 = vld [vmem:[%s320 + $0x18] sm:$0xff]
        %v399 = vld [vmem:[%s330] sm:$0xff]
        %v400 = vld [vmem:[%s330 + $0x8] sm:$0xff]
        %v401 = vld [vmem:[%s330 + $0x10] sm:$0xff]
        %v402 = vld [vmem:[%s330 + $0x18] sm:$0xff]
        %vm403 = vcmask 64512
        %v405 = vsel %vm403, %v391, 0
        %407 = vmatpush.msra.mxu0 0.0
        %408 = vmatpush.msra.mxu0 0.0
        %409 = vmatpush.msra.mxu0 0.0
        %410 = vmatpush.msra.mxu0 0.0
        %411 = vmatpush.msra.mxu0 0.0
        %412 = vmatpush.msra.mxu0 0.0
        %413 = vmatpush.msra.mxu0 0.0
        %414 = vmatpush.msra.mxu0 0.0
        %415 = vmatpush.msra.mxu0 0.0
        %416 = vmatpush.msra.mxu0 0.0
        %417 = vmatpush.msra.mxu0 0.0
        %418 = vmatpush.msra.mxu0 0.0
        %419 = vmatpush.msra.mxu0 0.0
        %420 = vmatpush.msra.mxu0 0.0
        %421 = vmatpush.msra.mxu0 0.0
        %422 = vmatpush.msra.mxu0 %v395
        %423 = vmatmul.f32.gmra.mxu0 %v405
        %v424 = vpop.f32.mrf.mxu0
        %v425 = vadd.f32 0.0, %v424
        %426 = vdwg.mxu0
        %v428 = vsel %vm403, %v392, 0
        %430 = vmatpush.msra.mxu0 0.0
        %431 = vmatpush.msra.mxu0 0.0
        %432 = vmatpush.msra.mxu0 0.0
        %433 = vmatpush.msra.mxu0 0.0
        %434 = vmatpush.msra.mxu0 0.0
        %435 = vmatpush.msra.mxu0 0.0
        %436 = vmatpush.msra.mxu0 0.0
        %437 = vmatpush.msra.mxu0 0.0
        %438 = vmatpush.msra.mxu0 0.0
        %439 = vmatpush.msra.mxu0 0.0
        %440 = vmatpush.msra.mxu0 0.0
        %441 = vmatpush.msra.mxu0 0.0
        %442 = vmatpush.msra.mxu0 0.0
        %443 = vmatpush.msra.mxu0 0.0
        %444 = vmatpush.msra.mxu0 0.0
        %445 = vmatpush.msra.mxu0 %v396
        %446 = vmatmul.f32.gmra.mxu0 %v428
        %v447 = vpop.f32.mrf.mxu0
        %v448 = vadd.f32 0.0, %v447
        %449 = vdwg.mxu0
        %v451 = vsel %vm403, %v393, 0
        %453 = vmatpush.msra.mxu0 0.0
        %454 = vmatpush.msra.mxu0 0.0
        %455 = vmatpush.msra.mxu0 0.0
        %456 = vmatpush.msra.mxu0 0.0
        %457 = vmatpush.msra.mxu0 0.0
        %458 = vmatpush.msra.mxu0 0.0
        %459 = vmatpush.msra.mxu0 0.0
        %460 = vmatpush.msra.mxu0 0.0
        %461 = vmatpush.msra.mxu0 0.0
        %462 = vmatpush.msra.mxu0 0.0
        %463 = vmatpush.msra.mxu0 0.0
        %464 = vmatpush.msra.mxu0 0.0
        %465 = vmatpush.msra.mxu0 0.0
        %466 = vmatpush.msra.mxu0 0.0
        %467 = vmatpush.msra.mxu0 0.0
        %468 = vmatpush.msra.mxu0 %v397
        %469 = vmatmul.f32.gmra.mxu0 %v451
        %v470 = vpop.f32.mrf.mxu0
        %v471 = vadd.f32 0.0, %v470
        %472 = vdwg.mxu0
        %v474 = vsel %vm403, %v394, 0
        %476 = vmatpush.msra.mxu0 0.0
        %477 = vmatpush.msra.mxu0 0.0
        %478 = vmatpush.msra.mxu0 0.0
        %479 = vmatpush.msra.mxu0 0.0
        %480 = vmatpush.msra.mxu0 0.0
        %481 = vmatpush.msra.mxu0 0.0
        %482 = vmatpush.msra.mxu0 0.0
        %483 = vmatpush.msra.mxu0 0.0
        %484 = vmatpush.msra.mxu0 0.0
        %485 = vmatpush.msra.mxu0 0.0
        %486 = vmatpush.msra.mxu0 0.0
        %487 = vmatpush.msra.mxu0 0.0
        %488 = vmatpush.msra.mxu0 0.0
        %489 = vmatpush.msra.mxu0 0.0
        %490 = vmatpush.msra.mxu0 0.0
        %491 = vmatpush.msra.mxu0 %v398
        %492 = vmatmul.f32.gmra.mxu0 %v474
        %v493 = vpop.f32.mrf.mxu0
        %v494 = vadd.f32 0.0, %v493
        %495 = vdwg.mxu0
        %v496 = vld [vmem:[#allocation2] sm:$0xff]
        %v497 = vld [vmem:[#allocation2 + $0x8] sm:$0xff]
        %v498 = vld [vmem:[#allocation2 + $0x10] sm:$0xff]
        %v499 = vld [vmem:[#allocation2 + $0x18] sm:$0xff]
        %v500 = vsel %vm403, %v425, -inf
        %501 = vmax.xlane.f32.xlu0 %v500
        %v502 = vpop.xlane.xlu0 %501
        %v503 = vsel %vm403, %v448, -inf
        %504 = vmax.xlane.f32.xlu0 %v503
        %v505 = vpop.xlane.xlu0 %504
        %v506 = vsel %vm403, %v471, -inf
        %507 = vmax.xlane.f32.xlu0 %v506
        %v508 = vpop.xlane.xlu0 %507
        %v509 = vsel %vm403, %v494, -inf
        %510 = vmax.xlane.f32.xlu0 %v509
        %v511 = vpop.xlane.xlu0 %510
        %v512 = vmax.f32 %v496, %v502
        %v513 = vmax.f32 %v497, %v505
        %v514 = vmax.f32 %v498, %v508
        %v515 = vmax.f32 %v499, %v511
        %v516 = vsub.f32 %v496, %v512
        %v517 = vsub.f32 %v497, %v513
        %v518 = vsub.f32 %v498, %v514
        %v519 = vsub.f32 %v499, %v515
        %v520 = vmul.f32 %v516, 1.442695
        %v521 = vpow.pop %v520
        %v522 = vmul.f32 %v517, 1.442695
        %v523 = vpow.pop %v522
        %v524 = vmul.f32 %v518, 1.442695
        %v525 = vpow.pop %v524
        %v526 = vmul.f32 %v519, 1.442695
        %v527 = vpow.pop %v526
        %529 = vset.pattern.permute.xlu0 0
        %530 = vperm.xlu0 %529, %v512
        %v531 = vpop.permute.xlu0 %530
        %534 = vset.pattern.permute.xlu0 0
        %535 = vperm.xlu0 %534, %v513
        %v536 = vpop.permute.xlu0 %535
        %539 = vset.pattern.permute.xlu0 0
        %540 = vperm.xlu0 %539, %v514
        %v541 = vpop.permute.xlu0 %540
        %544 = vset.pattern.permute.xlu0 0
        %545 = vperm.xlu0 %544, %v515
        %v546 = vpop.permute.xlu0 %545
        %v548 = vsub.f32 %v425, %v531
        %v549 = vsub.f32 %v448, %v536
        %v550 = vsub.f32 %v471, %v541
        %v551 = vsub.f32 %v494, %v546
        %v552 = vmul.f32 %v548, 1.442695
        %v553 = vpow.pop %v552
        %v554 = vmul.f32 %v549, 1.442695
        %v555 = vpow.pop %v554
        %v556 = vmul.f32 %v550, 1.442695
        %v557 = vpow.pop %v556
        %v558 = vmul.f32 %v551, 1.442695
        %v559 = vpow.pop %v558
        %v560 = vld [vmem:[#allocation3] sm:$0xff]
        %v561 = vld [vmem:[#allocation3 + $0x8] sm:$0xff]
        %v562 = vld [vmem:[#allocation3 + $0x10] sm:$0xff]
        %v563 = vld [vmem:[#allocation3 + $0x18] sm:$0xff]
        %v564 = vmul.f32 %v521, %v560
        %v565 = vmul.f32 %v523, %v561
        %v566 = vmul.f32 %v525, %v562
        %v567 = vmul.f32 %v527, %v563
        %v568 = vsel %vm403, %v553, 0.0
        %569 = vadd.xlane.f32.xlu0 %v568
        %v570 = vpop.xlane.xlu0 %569
        %v571 = vsel %vm403, %v555, 0.0
        %572 = vadd.xlane.f32.xlu0 %v571
        %v573 = vpop.xlane.xlu0 %572
        %v574 = vsel %vm403, %v557, 0.0
        %575 = vadd.xlane.f32.xlu0 %v574
        %v576 = vpop.xlane.xlu0 %575
        %v577 = vsel %vm403, %v559, 0.0
        %578 = vadd.xlane.f32.xlu0 %v577
        %v579 = vpop.xlane.xlu0 %578
        %v580 = vadd.f32 %v564, %v570
        %v581 = vadd.f32 %v565, %v573
        %v582 = vadd.f32 %v566, %v576
        %v583 = vadd.f32 %v567, %v579
        %vm584 = vcmask 7168
        %585 = vst.msk [vmem:[#allocation3] sm:$0xff] %vm584, %v580
        %586 = vst.msk [vmem:[#allocation3 + $0x8] sm:$0xff] %vm584, %v581
        %587 = vst.msk [vmem:[#allocation3 + $0x10] sm:$0xff] %vm584, %v582
        %588 = vst.msk [vmem:[#allocation3 + $0x18] sm:$0xff] %vm584, %v583
        %v590 = vsel %vm403, %v553, 0
        %592 = vmatpush.msra.mxu0 0.0
        %593 = vmatpush.msra.mxu0 0.0
        %594 = vmatpush.msra.mxu0 0.0
        %595 = vmatpush.msra.mxu0 0.0
        %596 = vmatpush.msra.mxu0 0.0
        %597 = vmatpush.msra.mxu0 0.0
        %598 = vmatpush.msra.mxu0 0.0
        %599 = vmatpush.msra.mxu0 0.0
        %600 = vmatpush.msra.mxu0 0.0
        %601 = vmatpush.msra.mxu0 0.0
        %602 = vmatpush.msra.mxu0 0.0
        %603 = vmatpush.msra.mxu0 0.0
        %604 = vmatpush.msra.mxu0 0.0
        %605 = vmatpush.msra.mxu0 0.0
        %606 = vmatpush.msra.mxu0 0.0
        %607 = vmatpush.msra.mxu0 %v399
        %608 = vmatmul.f32.gmra.mxu0 %v590
        %v609 = vpop.f32.mrf.mxu0
        %v610 = vadd.f32 0.0, %v609
        %611 = vdwg.mxu0
        %v613 = vsel %vm403, %v555, 0
        %615 = vmatpush.msra.mxu0 0.0
        %616 = vmatpush.msra.mxu0 0.0
        %617 = vmatpush.msra.mxu0 0.0
        %618 = vmatpush.msra.mxu0 0.0
        %619 = vmatpush.msra.mxu0 0.0
        %620 = vmatpush.msra.mxu0 0.0
        %621 = vmatpush.msra.mxu0 0.0
        %622 = vmatpush.msra.mxu0 0.0
        %623 = vmatpush.msra.mxu0 0.0
        %624 = vmatpush.msra.mxu0 0.0
        %625 = vmatpush.msra.mxu0 0.0
        %626 = vmatpush.msra.mxu0 0.0
        %627 = vmatpush.msra.mxu0 0.0
        %628 = vmatpush.msra.mxu0 0.0
        %629 = vmatpush.msra.mxu0 0.0
        %630 = vmatpush.msra.mxu0 %v400
        %631 = vmatmul.f32.gmra.mxu0 %v613
        %v632 = vpop.f32.mrf.mxu0
        %v633 = vadd.f32 0.0, %v632
        %634 = vdwg.mxu0
        %v636 = vsel %vm403, %v557, 0
        %638 = vmatpush.msra.mxu0 0.0
        %639 = vmatpush.msra.mxu0 0.0
        %640 = vmatpush.msra.mxu0 0.0
        %641 = vmatpush.msra.mxu0 0.0
        %642 = vmatpush.msra.mxu0 0.0
        %643 = vmatpush.msra.mxu0 0.0
        %644 = vmatpush.msra.mxu0 0.0
        %645 = vmatpush.msra.mxu0 0.0
        %646 = vmatpush.msra.mxu0 0.0
        %647 = vmatpush.msra.mxu0 0.0
        %648 = vmatpush.msra.mxu0 0.0
        %649 = vmatpush.msra.mxu0 0.0
        %650 = vmatpush.msra.mxu0 0.0
        %651 = vmatpush.msra.mxu0 0.0
        %652 = vmatpush.msra.mxu0 0.0
        %653 = vmatpush.msra.mxu0 %v401
        %654 = vmatmul.f32.gmra.mxu0 %v636
        %v655 = vpop.f32.mrf.mxu0
        %v656 = vadd.f32 0.0, %v655
        %657 = vdwg.mxu0
        %v659 = vsel %vm403, %v559, 0
        %661 = vmatpush.msra.mxu0 0.0
        %662 = vmatpush.msra.mxu0 0.0
        %663 = vmatpush.msra.mxu0 0.0
        %664 = vmatpush.msra.mxu0 0.0
        %665 = vmatpush.msra.mxu0 0.0
        %666 = vmatpush.msra.mxu0 0.0
        %667 = vmatpush.msra.mxu0 0.0
        %668 = vmatpush.msra.mxu0 0.0
        %669 = vmatpush.msra.mxu0 0.0
        %670 = vmatpush.msra.mxu0 0.0
        %671 = vmatpush.msra.mxu0 0.0
        %672 = vmatpush.msra.mxu0 0.0
        %673 = vmatpush.msra.mxu0 0.0
        %674 = vmatpush.msra.mxu0 0.0
        %675 = vmatpush.msra.mxu0 0.0
        %676 = vmatpush.msra.mxu0 %v402
        %677 = vmatmul.f32.gmra.mxu0 %v659
        %v678 = vpop.f32.mrf.mxu0
        %v679 = vadd.f32 0.0, %v678
        %680 = vdwg.mxu0
        %v681 = vld [vmem:[#allocation4] sm:$0xff]
        %v682 = vld [vmem:[#allocation4 + $0x8] sm:$0xff]
        %v683 = vld [vmem:[#allocation4 + $0x10] sm:$0xff]
        %v684 = vld [vmem:[#allocation4 + $0x18] sm:$0xff]
        %686 = vset.pattern.permute.xlu0 0
        %687 = vperm.xlu0 %686, %v521
        %v688 = vpop.permute.xlu0 %687
        %691 = vset.pattern.permute.xlu0 0
        %692 = vperm.xlu0 %691, %v523
        %v693 = vpop.permute.xlu0 %692
        %696 = vset.pattern.permute.xlu0 0
        %697 = vperm.xlu0 %696, %v525
        %v698 = vpop.permute.xlu0 %697
        %701 = vset.pattern.permute.xlu0 0
        %702 = vperm.xlu0 %701, %v527
        %v703 = vpop.permute.xlu0 %702
        %v705 = vmul.f32 %v688, %v681
        %v706 = vmul.f32 %v693, %v682
        %v707 = vmul.f32 %v698, %v683
        %v708 = vmul.f32 %v703, %v684
        %v709 = vadd.f32 %v705, %v610
        %v710 = vadd.f32 %v706, %v633
        %v711 = vadd.f32 %v707, %v656
        %v712 = vadd.f32 %v708, %v679
        %713 = vst.msk [vmem:[#allocation4] sm:$0xff] %vm403, %v709
        %714 = vst.msk [vmem:[#allocation4 + $0x8] sm:$0xff] %vm403, %v710
        %715 = vst.msk [vmem:[#allocation4 + $0x10] sm:$0xff] %vm403, %v711
        %716 = vst.msk [vmem:[#allocation4 + $0x18] sm:$0xff] %vm403, %v712
        %717 = vst.msk [vmem:[#allocation2] sm:$0xff] %vm584, %v512
        %718 = vst.msk [vmem:[#allocation2 + $0x8] sm:$0xff] %vm584, %v513
        %719 = vst.msk [vmem:[#allocation2 + $0x10] sm:$0xff] %vm584, %v514
        %720 = vst.msk [vmem:[#allocation2 + $0x18] sm:$0xff] %vm584, %v515
        // Predicated region
        $region61: #{tpu_custom_call.1} parent=39 // pred_check
          %p721 = pneg %p373
        $region62: #{tpu_custom_call.1} parent=39 // pred_check_branch
          %723 = sbr.rel (%p721) target = $region64
        $region63: #{tpu_custom_call.1} parent=39 // pred_region
          %v724 = vld [vmem:[#allocation3] sm:$0xff]
          %v725 = vld [vmem:[#allocation3 + $0x8] sm:$0xff]
          %v726 = vld [vmem:[#allocation3 + $0x10] sm:$0xff]
          %v727 = vld [vmem:[#allocation3 + $0x18] sm:$0xff]
          %v728 = vrcp.pop %v724
          %v729 = vrcp.pop %v725
          %v730 = vrcp.pop %v726
          %v731 = vrcp.pop %v727
          %v732 = vld [vmem:[#allocation4] sm:$0xff]
          %v733 = vld [vmem:[#allocation4 + $0x8] sm:$0xff]
          %v734 = vld [vmem:[#allocation4 + $0x10] sm:$0xff]
          %v735 = vld [vmem:[#allocation4 + $0x18] sm:$0xff]
          %737 = vset.pattern.permute.xlu0 0
          %738 = vperm.xlu0 %737, %v728
          %v739 = vpop.permute.xlu0 %738
          %742 = vset.pattern.permute.xlu0 0
          %743 = vperm.xlu0 %742, %v729
          %v744 = vpop.permute.xlu0 %743
          %747 = vset.pattern.permute.xlu0 0
          %748 = vperm.xlu0 %747, %v730
          %v749 = vpop.permute.xlu0 %748
          %752 = vset.pattern.permute.xlu0 0
          %753 = vperm.xlu0 %752, %v731
          %v754 = vpop.permute.xlu0 %753
          %v756 = vmul.f32 %v732, %v739
          %v757 = vmul.f32 %v733, %v744
          %v758 = vmul.f32 %v734, %v749
          %v759 = vmul.f32 %v735, %v754
          %v760 = vld [vmem:[#allocation11] sm:$0xff]
          %s761 = scalar_lea.vmem [#allocation11], 8
          %v762 = vld [vmem:[%s761] sm:$0xff]
          %v764 = vsel %vm403, %v757, 0
          %766 = vmatpush.msra.mxu0 0.0
          %767 = vmatpush.msra.mxu0 0.0
          %768 = vmatpush.msra.mxu0 0.0
          %769 = vmatpush.msra.mxu0 0.0
          %770 = vmatpush.msra.mxu0 0.0
          %771 = vmatpush.msra.mxu0 0.0
          %772 = vmatpush.msra.mxu0 0.0
          %773 = vmatpush.msra.mxu0 0.0
          %774 = vmatpush.msra.mxu0 0.0
          %775 = vmatpush.msra.mxu0 0.0
          %776 = vmatpush.msra.mxu0 0.0
          %777 = vmatpush.msra.mxu0 0.0
          %778 = vmatpush.msra.mxu0 0.0
          %779 = vmatpush.msra.mxu0 0.0
          %780 = vmatpush.msra.mxu0 0.0
          %781 = vmatpush.msra.mxu0 %v762
          %782 = vmatmul.f32.gmra.mxu0 %v764
          %v783 = vpop.f32.mrf.mxu0
          %v784 = vadd.f32 0.0, %v783
          %785 = vdwg.mxu0
          %v787 = vsel %vm403, %v756, 0
          %789 = vmatpush.msra.mxu0 0.0
          %790 = vmatpush.msra.mxu0 0.0
          %791 = vmatpush.msra.mxu0 0.0
          %792 = vmatpush.msra.mxu0 0.0
          %793 = vmatpush.msra.mxu0 0.0
          %794 = vmatpush.msra.mxu0 0.0
          %795 = vmatpush.msra.mxu0 0.0
          %796 = vmatpush.msra.mxu0 0.0
          %797 = vmatpush.msra.mxu0 0.0
          %798 = vmatpush.msra.mxu0 0.0
          %799 = vmatpush.msra.mxu0 0.0
          %800 = vmatpush.msra.mxu0 0.0
          %801 = vmatpush.msra.mxu0 0.0
          %802 = vmatpush.msra.mxu0 0.0
          %803 = vmatpush.msra.mxu0 0.0
          %804 = vmatpush.msra.mxu0 %v760
          %805 = vmatmul.f32.gmra.mxu0 %v787
          %v806 = vpop.f32.mrf.mxu0
          %v807 = vadd.f32 %v784, %v806
          %808 = vdwg.mxu0
          %s809 = scalar_lea.vmem [#allocation11], 16
          %v810 = vld [vmem:[%s809] sm:$0xff]
          %v812 = vsel %vm403, %v758, 0
          %814 = vmatpush.msra.mxu0 0.0
          %815 = vmatpush.msra.mxu0 0.0
          %816 = vmatpush.msra.mxu0 0.0
          %817 = vmatpush.msra.mxu0 0.0
          %818 = vmatpush.msra.mxu0 0.0
          %819 = vmatpush.msra.mxu0 0.0
          %820 = vmatpush.msra.mxu0 0.0
          %821 = vmatpush.msra.mxu0 0.0
          %822 = vmatpush.msra.mxu0 0.0
          %823 = vmatpush.msra.mxu0 0.0
          %824 = vmatpush.msra.mxu0 0.0
          %825 = vmatpush.msra.mxu0 0.0
          %826 = vmatpush.msra.mxu0 0.0
          %827 = vmatpush.msra.mxu0 0.0
          %828 = vmatpush.msra.mxu0 0.0
          %829 = vmatpush.msra.mxu0 %v810
          %830 = vmatmul.f32.gmra.mxu0 %v812
          %v831 = vpop.f32.mrf.mxu0
          %v832 = vadd.f32 0.0, %v831
          %833 = vdwg.mxu0
          %v834 = vadd.f32 %v807, %v832
          %s835 = scalar_lea.vmem [#allocation11], 24
          %v836 = vld [vmem:[%s835] sm:$0xff]
          %v838 = vsel %vm403, %v759, 0
          %840 = vmatpush.msra.mxu0 0.0
          %841 = vmatpush.msra.mxu0 0.0
          %842 = vmatpush.msra.mxu0 0.0
          %843 = vmatpush.msra.mxu0 0.0
          %844 = vmatpush.msra.mxu0 0.0
          %845 = vmatpush.msra.mxu0 0.0
          %846 = vmatpush.msra.mxu0 0.0
          %847 = vmatpush.msra.mxu0 0.0
          %848 = vmatpush.msra.mxu0 0.0
          %849 = vmatpush.msra.mxu0 0.0
          %850 = vmatpush.msra.mxu0 0.0
          %851 = vmatpush.msra.mxu0 0.0
          %852 = vmatpush.msra.mxu0 0.0
          %853 = vmatpush.msra.mxu0 0.0
          %854 = vmatpush.msra.mxu0 0.0
          %855 = vmatpush.msra.mxu0 %v836
          %856 = vmatmul.f32.gmra.mxu0 %v838
          %v857 = vpop.f32.mrf.mxu0
          %v858 = vadd.f32 0.0, %v857
          %859 = vdwg.mxu0
          %v860 = vadd.f32 %v834, %v858
          %v861 = vld [vmem:[%s4] sm:$0x1]
          %v863 = vperm.slane %v861, 0
          %v865 = vadd.f32 %v860, %v863
          %vm866 = vcmask 261120
          %867 = vst.msk [vmem:[%s372] sm:$0xff] %vm866, %v865
        $region64: #{tpu_custom_call.1} parent=39 // pred_fallthru
          _
        %s868 = sand.u32 %s181, 1
        %s869 = scalar_lea.sflag [#allocation7], %s868
        %s870 = sand.u32 %s181, 1
        %s871 = smul.addr %s870, 8
        %s872 = scalar_lea.vmem [#allocation13], %s871
        // Predicated region
        $region65: #{tpu_custom_call.1} parent=39 // pred_check
          %p873 = pneg %p191
        $region66: #{tpu_custom_call.1} parent=39 // pred_check_branch
          %875 = sbr.rel (%p873) target = $region68
        $region67: #{tpu_custom_call.1} parent=39 // pred_region
          %877 = vsyncadd %s869, 0
          %s878 = sadd.s32 %s32, %s31
          %s879 = smul.addr %s878, 8
          %s880 = scalar_lea.hbm %s5, %s879
          %s882 = sshll.u32 %s872, 4
          %s883 = int_to_ptr.vmem [resolvable:$true] %s882
          %s884 = sshll.u32 %s880, 4
          %s885 = int_to_ptr.hbm [resolvable:$true] %s884
          %887 = dma.vmem_to_hbm [thread:$0]  %s883, 128, %s885, %s869
        $region68: #{tpu_custom_call.1} parent=39 // pred_fallthru
          _
      $region40: #{tpu_custom_call.1} parent=5 // pred_fallthru
        _
      %p888 = scmp.le.s32.totalorder 2, %s21
      // Predicated region
      $region69: #{tpu_custom_call.1} parent=5 // pred_check
        %p889 = pneg %p888
      $region70: #{tpu_custom_call.1} parent=5 // pred_check_branch
        %891 = sbr.rel (%p889) target = $region72
      $region71: #{tpu_custom_call.1} parent=5 // pred_region
        %s892 = ssub.s32 %s21, 2
        // Predicated region
        $region73: #{tpu_custom_call.1} parent=71 // pred_check
          %p893 = pneg %p197
        $region74: #{tpu_custom_call.1} parent=71 // pred_check_branch
          %895 = sbr.rel (%p893) target = $region76
        $region75: #{tpu_custom_call.1} parent=71 // pred_region
          %s896 = sand.u32 %s182, 1
          %s897 = scalar_lea.sflag [#allocation7], %s896
          %s898 = sand.u32 %s182, 1
          %s899 = smul.addr %s898, 8
          %s900 = scalar_lea.vmem [#allocation13], %s899
          %902 = dma.done %s897, 128
        $region76: #{tpu_custom_call.1} parent=71 // pred_fallthru
          _
      $region72: #{tpu_custom_call.1} parent=5 // pred_fallthru
        _
    $region6: #{tpu_custom_call.1} parent=1 // loop_footer
      %s25 = sadd.s32 1, %s21
    $region7: #{tpu_custom_call.1} parent=1 // loop_footer_branch
      %20 = sbr.rel target = $region3
    $region8: #{tpu_custom_call.1} parent=1 // loop_exit
      _
    %903 = vsyncpa [#allocation6], 1
    %s904 = scalar_lea.sflag [#allocation6], 1
    %905 = vsyncpa %s904, 1
    %906 = vsyncpa [#allocation9], 1
    %s907 = scalar_lea.sflag [#allocation9], 1
    %908 = vsyncpa %s907, 1
    %909 = vsyncpa [#allocation12], 1
    %910 = vsyncpa [#allocation7], 1
    %s911 = scalar_lea.sflag [#allocation7], 1
    %912 = vsyncpa %s911, 1

</llo_original>
